<compile_context>
chip_gen: v7x
topology: tpu7x:2x2x1
jax: 0.10.0
libtpu: 0.0.40
codegen_flags: <defaults>
</compile_context>

<pallas_src>
import jax
import jax.numpy as jnp
from jax.experimental import pallas as pl
from jax.experimental.pallas import tpu as pltpu


TARGET_BLOCK_BYTES = 2 * 1024 * 1024  # ~2 MiB per buffer: ~85% of HBM roofline,
                                      # 4 buffers (in+out, double-buffered) = 8 MiB.


def _denorm_kernel(x_ref, o_ref):
    # Elementwise hot path on the VPU: (x + 1) * 0.5.
    o_ref[...] = (x_ref[...] + 1.0) * 0.5


def _round_up(x, m):
    return (x + m - 1) // m * m


def _pick_lane(n):
    """Largest lane width (multiple of 128) that divides n -> no padding needed."""
    for lane in (4096, 2048, 1024, 512, 256, 128):
        if n % lane == 0:
            return lane, False
    # Rare fallback (n not a multiple of 128): minimal pad to a 128-lane slab.
    return 128, True


def denorm_pm1_into_01(img, *, donate_input=False):
    """Pallas equivalent of denormalize_pm1_into_01: (img + 1) / 2."""
    orig_shape = img.shape

    # torch semantics: integer tensor / 2 (true division) promotes to float.
    if not jnp.issubdtype(img.dtype, jnp.floating):
        img = img.astype(jnp.float32)
    dtype = img.dtype
    itemsize = jnp.dtype(dtype).itemsize
    n = img.size

    if n == 0:
        return ((img + 1.0) * 0.5).reshape(orig_shape)

    lane, needs_pad = _pick_lane(n)

    flat = img.reshape(-1)  # contiguous reshape: free (bitcast), no HBM pass
    if needs_pad:
        n_padded = _round_up(n, lane)
        flat = jnp.pad(flat, (0, n_padded - n))
    else:
        n_padded = n

    rows = n_padded // lane
    x2d = flat.reshape(rows, lane)

    # Sublane alignment for the tiled path: 8 (f32) / 16 (bf16) / 32 (int8/fp8).
    sub_align = max(8, 32 // itemsize)
    rows_per_block = max(1, TARGET_BLOCK_BYTES // (lane * itemsize))

    if rows <= rows_per_block:
        # Single full-extent block; exempt from (8,128) divisibility, no padding.
        block_rows = rows
        grid = (1,)
    else:
        block_rows = max(sub_align, (rows_per_block // sub_align) * sub_align)
        # Ragged last block is masked by Pallas -> no row padding required.
        grid = (pl.cdiv(rows, block_rows),)

    cost = pl.CostEstimate(
        flops=2 * n,
        transcendentals=0,
        bytes_accessed=2 * n * itemsize,
    )

    call_kwargs = dict(
        out_shape=jax.ShapeDtypeStruct((rows, lane), dtype),
        grid_spec=pltpu.PrefetchScalarGridSpec(
            num_scalar_prefetch=0,
            grid=grid,
            in_specs=[pl.BlockSpec((block_rows, lane), lambda i: (i, 0))],
            out_specs=pl.BlockSpec((block_rows, lane), lambda i: (i, 0)),
        ),
        compiler_params=pltpu.CompilerParams(
            # On v7x, switch to pltpu.CORE_PARALLEL if "parallel" does not shard
            # this axis across the 2 TensorCores in the trace.
            dimension_semantics=("parallel",),
        ),
        cost_estimate=cost,
    )
    if donate_input:
        # Only useful when the caller donates the input buffer at the jit boundary;
        # otherwise XLA would insert a defensive copy.
        call_kwargs["input_output_aliases"] = {0: 0}

    out2d = pl.pallas_call(_denorm_kernel, **call_kwargs)(x2d)

    if needs_pad:
        # Drop tail padding (rare path) before restoring the original shape.
        return out2d.reshape(-1)[:n].reshape(orig_shape)
    return out2d.reshape(orig_shape)


if __name__ == "__main__":
    key = jax.random.PRNGKey(0)
    # NCHW like PyTorch: batch=2, channels=4, spatial=16x16, values in [-1, 1].
    x = jax.random.uniform(key, (2, 4, 16, 16), dtype=jnp.float32,
                           minval=-1.0, maxval=1.0)

    y = denorm_pm1_into_01(x)
    jax.block_until_ready(y)

    # Correctness check against the pure-JAX reference.
    y_ref = (x + 1.0) / 2.0
    assert y.shape == x.shape and y.dtype == x.dtype
    assert jnp.allclose(y, y_ref, atol=1e-6), "mismatch vs reference"

    # Also exercise a shape that triggers the tiled (ragged-grid) path.
    x2 = jax.random.uniform(jax.random.PRNGKey(1), (3, 3, 192, 1024),
                            dtype=jnp.float32, minval=-1.0, maxval=1.0)
    y2 = denorm_pm1_into_01(x2)
    jax.block_until_ready(y2)
    assert jnp.allclose(y2, (x2 + 1.0) / 2.0, atol=1e-6), "mismatch (tiled path)"

    print("KERNEL_OK")
</pallas_src>

<mosaic_0001>
module attributes {stable_mosaic.version = 11 : i64} {
  func.func @_denorm_kernel(%arg0: i32, %arg1: memref<1x2048xf32, #tpu.memory_space<vmem>>, %arg2: memref<1x2048xf32, #tpu.memory_space<vmem>>) attributes {dimension_semantics = [#tpu.dimension_semantics<parallel>], iteration_bounds = array<i64: 1>, scalar_prefetch = 0 : i64, scratch_operands = 0 : i64, tpu.core_type = #tpu.core_type<tc>, window_params = [{transform_indices = @transform_0, window_bounds = array<i64: 1, 2048>}, {transform_indices = @transform_1, window_bounds = array<i64: 1, 2048>}]} {
    %c0 = arith.constant 0 : index
    %c0_0 = arith.constant 0 : index
    %0 = vector.load %arg1[%c0, %c0_0] : memref<1x2048xf32, #tpu.memory_space<vmem>>, vector<1x2048xf32>
    %cst = arith.constant 1.000000e+00 : f32
    %1 = vector.broadcast %cst : f32 to vector<1x2048xf32>
    %2 = arith.addf %0, %1 : vector<1x2048xf32>
    %cst_1 = arith.constant 5.000000e-01 : f32
    %3 = vector.broadcast %cst_1 : f32 to vector<1x2048xf32>
    %4 = arith.mulf %2, %3 : vector<1x2048xf32>
    %c0_2 = arith.constant 0 : index
    %c0_3 = arith.constant 0 : index
    %5 = vector.load %arg2[%c0_2, %c0_3] : memref<1x2048xf32, #tpu.memory_space<vmem>>, vector<1x2048xf32>
    tpu.vector_store %arg2[%c0_2, %c0_3], %4 {strides = array<i32>} : memref<1x2048xf32, #tpu.memory_space<vmem>>, vector<1x2048xf32>,
    return
  }
  func.func @transform_0(%arg0: i32) -> (i32, i32) {
    %c0_i32 = arith.constant 0 : i32
    %c0_i32_0 = arith.constant 0 : i32
    return %arg0, %c0_i32 : i32, i32
  }
  func.func @transform_1(%arg0: i32) -> (i32, i32) {
    %c0_i32 = arith.constant 0 : i32
    %c0_i32_0 = arith.constant 0 : i32
    return %arg0, %c0_i32 : i32, i32
  }
}

</mosaic_0001>

<llo_original>
// kernel: tpu_custom_call.1
$region0: #{tpu_custom_call.1}
  #allocation0 [shape = 'u32[]', space=smem, size = 0x4, offset = 0x4, fixed_abs, tag = 'smem constant byte address 0x4 - core index']
  #allocation1 [shape = 'u32[144,128]{1,0:T(1,128)}', space=vmem, size = 0x12000, scoped, tag = 'internal scratch']
  %s0 = inlined_call_operand.hbm [shape: f32[1,2048], index: 0, kind: input, shape index: {}]
  %s1 = inlined_call_operand.hbm [shape: f32[1,2048], index: 1, kind: output, shape index: {}]
  %s2 = sld [smem:[#allocation0]]
  $region18: #{tpu_custom_call.1} parent=0
    _
  %s4 = ssub.s32 1, %s2
  %s5 = scalar_select 0, %s4, %s2
  $region1: #{tpu_custom_call.1} parent=0
    #allocation2 [shape = 'u8[8192]{0}', space=vmem, size = 0x2000, scoped, tag = 'input window, operand 0, single buffered']
    #allocation3 [shape = 's32[1]{0}', space=sflag, size = 0x4, scoped, tag = 'scoped memory for tpu_custom_call.1']
    #allocation4 [shape = 's32[1]{0}', space=sflag, size = 0x4, scoped, tag = 'scoped memory for tpu_custom_call.1']
    #allocation5 [shape = 'u8[8192]{0}', space=vmem, size = 0x2000, scoped, tag = 'output window, operand 0, single buffered']
    %6 = vsyncpa [#allocation3], 0
    %7 = vsyncpa [#allocation4], 0
    // Predicated region
    $region2: #{tpu_custom_call.1} parent=1 // pred_check
      _
    $region3: #{tpu_custom_call.1} parent=1 // pred_check_branch
      %9 = sbr.rel (0) target = $region5
    $region4: #{tpu_custom_call.1} parent=1 // pred_region
      %s11 = ssub.s32 256, 256
      %12 = vsyncadd [#allocation3], %s11
      %s14 = sshll.u32 [#allocation2], 4
      %s15 = int_to_ptr.vmem [resolvable:$true] %s14
      %17 = dma.hbm_to_vmem [thread:$0]  %s0, 256, %s15, [#allocation3]
    $region5: #{tpu_custom_call.1} parent=1 // pred_fallthru
      _
    // Predicated region
    $region6: #{tpu_custom_call.1} parent=1 // pred_check
      _
    $region7: #{tpu_custom_call.1} parent=1 // pred_check_branch
      %19 = sbr.rel (0) target = $region9
    $region8: #{tpu_custom_call.1} parent=1 // pred_region
      %20 = dma.done [#allocation3], 256
    $region9: #{tpu_custom_call.1} parent=1 // pred_fallthru
      _
    %v21 = vld [vmem:[#allocation2] sm:$0xff]
    %v22 = vld [vmem:[#allocation2 + $0x8] sm:$0xff]
    %v23 = vadd.f32 %v21, 1.0
    %v24 = vadd.f32 %v22, 1.0
    %v25 = vmul.f32 %v23, 0.5
    %v26 = vmul.f32 %v24, 0.5
    %27 = vst [vmem:[#allocation5] sm:$0xff] %v25
    %28 = vst [vmem:[#allocation5 + $0x8] sm:$0xff] %v26
    // Predicated region
    $region10: #{tpu_custom_call.1} parent=1 // pred_check
      _
    $region11: #{tpu_custom_call.1} parent=1 // pred_check_branch
      %30 = sbr.rel (0) target = $region13
    $region12: #{tpu_custom_call.1} parent=1 // pred_region
      %s32 = ssub.s32 256, 256
      %33 = vsyncadd [#allocation4], %s32
      %s35 = sshll.u32 [#allocation5], 4
      %s36 = int_to_ptr.vmem [resolvable:$true] %s35
      %38 = dma.vmem_to_hbm [thread:$0]  %s36, 256, %s1, [#allocation4]
    $region13: #{tpu_custom_call.1} parent=1 // pred_fallthru
      _
    // Predicated region
    $region14: #{tpu_custom_call.1} parent=1 // pred_check
      _
    $region15: #{tpu_custom_call.1} parent=1 // pred_check_branch
      %40 = sbr.rel (0) target = $region17
    $region16: #{tpu_custom_call.1} parent=1 // pred_region
      %41 = dma.done [#allocation4], 256
    $region17: #{tpu_custom_call.1} parent=1 // pred_fallthru
      _
    %42 = vsyncpa [#allocation3], 1
    %43 = vsyncpa [#allocation4], 1

</llo_original>
